<compile_context>
chip_gen: v7x
topology: tpu7x:2x2x1
jax: 0.10.0
libtpu: 0.0.40
codegen_flags: <defaults>
</compile_context>

<pallas_src>
import functools

import jax
import jax.numpy as jnp
from jax.experimental import pallas as pl
from jax.experimental.pallas import tpu as pltpu


def _mixprop_kernel(m_ref, x_ref, w_ref, b_ref, o_ref, *, gdep, alpha):
    """One (batch, L-block) tile.

    m_ref : (V, V)                         pre-combined, pre-scaled, row-normalized adj
    x_ref : (1, 1, V, C*L_blk)             input tile, lane index = c*L_blk + l
    w_ref : (gdep+1, C*L_blk, c_out*L_blk) per-hop 1x1-conv weights (kron'ed with I_L)
    b_ref : (1, c_out*L_blk)               bias broadcast over l
    o_ref : (1, 1, V, c_out*L_blk)         output tile, lane index = o*L_blk + l
    """
    m = m_ref[...]                       # (V, V)
    x = x_ref[0, 0]                      # (V, C*L_blk)

    # hop 0 contribution (per-hop accumulation: no concatenation of hops)
    y = jnp.dot(x, w_ref[0], preferred_element_type=jnp.float32) + b_ref[...]

    ax = alpha * x                       # hoisted: reused by every hop
    h = x
    for k in range(1, gdep + 1):         # static unrolled hop chain
        h = ax + jnp.dot(m, h, preferred_element_type=jnp.float32)
        y = y + jnp.dot(h, w_ref[k], preferred_element_type=jnp.float32)

    o_ref[0, 0] = y                      # (V, c_out*L_blk)


def mixprop_forward(x, adjs, weight, bias, *, gdep, alpha, beta, l_block=None):
    """x: (N, c_in, V, L) f32; adjs: tuple of (V, V); weight: (c_out, (gdep+1)*c_in, 1, 1);
    bias: (c_out,).  Returns (N, c_out, V, L) matching the PyTorch module."""
    N, C, V, L = x.shape
    c_out = weight.shape[0]
    if l_block is None:
        l_block = L                      # whole sequence per block (tiny shapes)
    assert L % l_block == 0
    LB = L // l_block
    CL = C * l_block
    OL = c_out * l_block

    # ---- hoisted adjacency preprocessing (was recomputed every grid step) ----
    def _norm(a):
        a = a.astype(jnp.float32) + jnp.eye(V, dtype=jnp.float32)
        return a / jnp.sum(a, axis=1, keepdims=True)

    adjs = tuple(adjs)
    if len(adjs) >= 2:
        gamma = 1.0 - alpha - beta
        m = beta * _norm(adjs[0]) + gamma * _norm(adjs[1])
    else:
        m = (1.0 - alpha) * _norm(adjs[0])
    m = m.astype(jnp.float32)

    # ---- input relayout: (N, C, V, L) -> (N, LB, V, C*l_block) ----
    x_p = (x.astype(jnp.float32)
             .reshape(N, C, V, LB, l_block)
             .transpose(0, 3, 2, 1, 4)
             .reshape(N, LB, V, CL))

    # ---- per-hop conv weights: W_k (c_out, C) -> kron(W_k^T, I_L)  (C*L, c_out*L) ----
    w2 = weight.reshape(c_out, (gdep + 1) * C).astype(jnp.float32)
    eye_l = jnp.eye(l_block, dtype=jnp.float32)
    w_kron = jnp.stack(
        [jnp.kron(w2[:, k * C:(k + 1) * C].T, eye_l) for k in range(gdep + 1)],
        axis=0)                                           # (gdep+1, CL, OL)
    b_big = jnp.repeat(bias.astype(jnp.float32), l_block).reshape(1, OL)

    kernel = functools.partial(_mixprop_kernel, gdep=gdep, alpha=float(alpha))

    out = pl.pallas_call(
        kernel,
        out_shape=jax.ShapeDtypeStruct((N, LB, V, OL), jnp.float32),
        grid=(N, LB),
        in_specs=[
            pl.BlockSpec((V, V), lambda n, lb: (0, 0)),                 # M (resident)
            pl.BlockSpec((1, 1, V, CL), lambda n, lb: (n, lb, 0, 0)),   # x tile
            pl.BlockSpec((gdep + 1, CL, OL), lambda n, lb: (0, 0, 0)),  # conv weights
            pl.BlockSpec((1, OL), lambda n, lb: (0, 0)),                # bias
        ],
        out_specs=pl.BlockSpec((1, 1, V, OL), lambda n, lb: (n, lb, 0, 0)),
        compiler_params=pltpu.CompilerParams(
            dimension_semantics=("parallel", "parallel")),
    )(m, x_p, w_kron, b_big)

    # (N, LB, V, c_out*l_block) -> (N, c_out, V, L)
    out = (out.reshape(N, LB, V, c_out, l_block)
              .transpose(0, 3, 2, 1, 4)
              .reshape(N, c_out, V, L))
    return out


def mixprop_ref(x, adjs, weight, bias, *, gdep, alpha, beta):
    """Plain-JAX reference mirroring the PyTorch forward."""
    mats = []
    for adj in adjs:
        a = adj + jnp.eye(adj.shape[0], dtype=adj.dtype)
        d = a.sum(axis=1)
        mats.append(a / d[:, None])
    h = x
    out = [h]
    gamma = 1.0 - alpha - beta
    for _ in range(gdep):
        h = (alpha * x
             + beta * jnp.einsum('ncwl,vw->ncvl', h, mats[0])
             + gamma * jnp.einsum('ncwl,vw->ncvl', h, mats[1]))
        out.append(h)
    ho = jnp.concatenate(out, axis=1)
    w2 = weight.reshape(weight.shape[0], -1)
    return jnp.einsum('oj,njvl->novl', w2, ho) + bias[None, :, None, None]


if __name__ == "__main__":
    key = jax.random.PRNGKey(0)
    N, C, V, L = 2, 4, 16, 8                 # batch, c_in, nodes, seq
    gdep, alpha, beta = 2, 0.05, 0.45
    c_out = 8
    # dropout is stored by the PyTorch module but never applied in forward().

    k1, k2, k3, k4, k5 = jax.random.split(key, 5)
    x = jax.random.normal(k1, (N, C, V, L), jnp.float32)
    adj0 = jnp.abs(jax.random.normal(k2, (V, V), jnp.float32))
    adj1 = jnp.abs(jax.random.normal(k3, (V, V), jnp.float32))
    weight = 0.1 * jax.random.normal(k4, (c_out, (gdep + 1) * C, 1, 1), jnp.float32)
    bias = 0.1 * jax.random.normal(k5, (c_out,), jnp.float32)

    y = mixprop_forward(x, (adj0, adj1), weight, bias,
                        gdep=gdep, alpha=alpha, beta=beta)
    y = jax.block_until_ready(y)

    y_ref = mixprop_ref(x, (adj0, adj1), weight, bias,
                        gdep=gdep, alpha=alpha, beta=beta)
    assert y.shape == (N, c_out, V, L), y.shape
    assert jnp.allclose(y, y_ref, atol=1e-4, rtol=1e-4), \
        float(jnp.max(jnp.abs(y - y_ref)))
    print("KERNEL_OK")
</pallas_src>

<mosaic_0001>
module attributes {stable_mosaic.version = 11 : i64} {
  func.func @_mixprop_kernel(%arg0: i32, %arg1: i32, %arg2: memref<16x16xf32, #tpu.memory_space<vmem>>, %arg3: memref<1x1x16x32xf32, #tpu.memory_space<vmem>>, %arg4: memref<3x32x64xf32, #tpu.memory_space<vmem>>, %arg5: memref<1x64xf32, #tpu.memory_space<vmem>>, %arg6: memref<1x1x16x64xf32, #tpu.memory_space<vmem>>) attributes {dimension_semantics = [#tpu.dimension_semantics<parallel>, #tpu.dimension_semantics<parallel>], iteration_bounds = array<i64: 2, 1>, scalar_prefetch = 0 : i64, scratch_operands = 0 : i64, tpu.core_type = #tpu.core_type<tc>, window_params = [{pipeline_mode = #tpu.pipeline_mode<synchronous>, transform_indices = @transform_0, window_bounds = array<i64: 16, 16>}, {transform_indices = @transform_1, window_bounds = array<i64: 1, 1, 16, 32>}, {pipeline_mode = #tpu.pipeline_mode<synchronous>, transform_indices = @transform_2, window_bounds = array<i64: 3, 32, 64>}, {pipeline_mode = #tpu.pipeline_mode<synchronous>, transform_indices = @transform_3, window_bounds = array<i64: 1, 64>}, {transform_indices = @transform_4, window_bounds = array<i64: 1, 1, 16, 64>}]} {
    %c0 = arith.constant 0 : index
    %c0_0 = arith.constant 0 : index
    %0 = vector.load %arg2[%c0, %c0_0] : memref<16x16xf32, #tpu.memory_space<vmem>>, vector<16x16xf32>
    %c0_1 = arith.constant 0 : index
    %c0_2 = arith.constant 0 : index
    %c0_3 = arith.constant 0 : index
    %c0_4 = arith.constant 0 : index
    %1 = vector.load %arg3[%c0_1, %c0_2, %c0_3, %c0_4] : memref<1x1x16x32xf32, #tpu.memory_space<vmem>>, vector<1x1x16x32xf32>
    %2 = vector.shape_cast %1 : vector<1x1x16x32xf32> to vector<16x32xf32>
    %c0_5 = arith.constant 0 : index
    %c0_6 = arith.constant 0 : index
    %c0_7 = arith.constant 0 : index
    %3 = vector.load %arg4[%c0_5, %c0_6, %c0_7] : memref<3x32x64xf32, #tpu.memory_space<vmem>>, vector<1x32x64xf32>
    %4 = vector.shape_cast %3 : vector<1x32x64xf32> to vector<32x64xf32>
    %cst = arith.constant dense<0.000000e+00> : vector<16x64xf32>
    %5 = tpu.matmul %2, %4, %cst {dimension_numbers = #tpu.dot_dimension_numbers<[1], [0], [0], [1], [0, 0, 1, 1], [], []>} : vector<16x32xf32>, vector<32x64xf32>, vector<16x64xf32> -> vector<16x64xf32>
    %c0_8 = arith.constant 0 : index
    %c0_9 = arith.constant 0 : index
    %6 = vector.load %arg5[%c0_8, %c0_9] : memref<1x64xf32, #tpu.memory_space<vmem>>, vector<1x64xf32>
    %7 = vector.broadcast %6 : vector<1x64xf32> to vector<16x64xf32>
    %8 = arith.addf %5, %7 : vector<16x64xf32>
    %cst_10 = arith.constant 5.000000e-02 : f32
    %9 = vector.broadcast %cst_10 : f32 to vector<16x32xf32>
    %10 = arith.mulf %9, %2 : vector<16x32xf32>
    %cst_11 = arith.constant dense<0.000000e+00> : vector<16x32xf32>
    %11 = tpu.matmul %0, %2, %cst_11 {dimension_numbers = #tpu.dot_dimension_numbers<[1], [0], [0], [1], [0, 0, 1, 1], [], []>} : vector<16x16xf32>, vector<16x32xf32>, vector<16x32xf32> -> vector<16x32xf32>
    %12 = arith.addf %10, %11 : vector<16x32xf32>
    %c1 = arith.constant 1 : index
    %c0_12 = arith.constant 0 : index
    %c0_13 = arith.constant 0 : index
    %13 = vector.load %arg4[%c1, %c0_12, %c0_13] : memref<3x32x64xf32, #tpu.memory_space<vmem>>, vector<1x32x64xf32>
    %14 = vector.shape_cast %13 : vector<1x32x64xf32> to vector<32x64xf32>
    %cst_14 = arith.constant dense<0.000000e+00> : vector<16x64xf32>
    %15 = tpu.matmul %12, %14, %cst_14 {dimension_numbers = #tpu.dot_dimension_numbers<[1], [0], [0], [1], [0, 0, 1, 1], [], []>} : vector<16x32xf32>, vector<32x64xf32>, vector<16x64xf32> -> vector<16x64xf32>
    %16 = arith.addf %8, %15 : vector<16x64xf32>
    %cst_15 = arith.constant dense<0.000000e+00> : vector<16x32xf32>
    %17 = tpu.matmul %0, %12, %cst_15 {dimension_numbers = #tpu.dot_dimension_numbers<[1], [0], [0], [1], [0, 0, 1, 1], [], []>} : vector<16x16xf32>, vector<16x32xf32>, vector<16x32xf32> -> vector<16x32xf32>
    %18 = arith.addf %10, %17 : vector<16x32xf32>
    %c2 = arith.constant 2 : index
    %c0_16 = arith.constant 0 : index
    %c0_17 = arith.constant 0 : index
    %19 = vector.load %arg4[%c2, %c0_16, %c0_17] : memref<3x32x64xf32, #tpu.memory_space<vmem>>, vector<1x32x64xf32>
    %20 = vector.shape_cast %19 : vector<1x32x64xf32> to vector<32x64xf32>
    %cst_18 = arith.constant dense<0.000000e+00> : vector<16x64xf32>
    %21 = tpu.matmul %18, %20, %cst_18 {dimension_numbers = #tpu.dot_dimension_numbers<[1], [0], [0], [1], [0, 0, 1, 1], [], []>} : vector<16x32xf32>, vector<32x64xf32>, vector<16x64xf32> -> vector<16x64xf32>
    %22 = arith.addf %16, %21 : vector<16x64xf32>
    %c0_19 = arith.constant 0 : index
    %c0_20 = arith.constant 0 : index
    %c0_21 = arith.constant 0 : index
    %c0_22 = arith.constant 0 : index
    %23 = vector.load %arg6[%c0_19, %c0_20, %c0_21, %c0_22] : memref<1x1x16x64xf32, #tpu.memory_space<vmem>>, vector<1x1x16x64xf32>
    %24 = vector.shape_cast %23 : vector<1x1x16x64xf32> to vector<16x64xf32>
    %25 = vector.shape_cast %22 : vector<16x64xf32> to vector<1x1x16x64xf32>
    tpu.vector_store %arg6[%c0_19, %c0_20, %c0_21, %c0_22], %25 {strides = array<i32>} : memref<1x1x16x64xf32, #tpu.memory_space<vmem>>, vector<1x1x16x64xf32>,
    return
  }
  func.func @transform_0(%arg0: i32, %arg1: i32) -> (i32, i32) {
    %c0_i32 = arith.constant 0 : i32
    %c0_i32_0 = arith.constant 0 : i32
    %c0_i32_1 = arith.constant 0 : i32
    return %c0_i32, %c0_i32_0 : i32, i32
  }
  func.func @transform_1(%arg0: i32, %arg1: i32) -> (i32, i32, i32, i32) {
    %c0_i32 = arith.constant 0 : i32
    %c0_i32_0 = arith.constant 0 : i32
    %c0_i32_1 = arith.constant 0 : i32
    return %arg0, %arg1, %c0_i32, %c0_i32_0 : i32, i32, i32, i32
  }
  func.func @transform_2(%arg0: i32, %arg1: i32) -> (i32, i32, i32) {
    %c0_i32 = arith.constant 0 : i32
    %c0_i32_0 = arith.constant 0 : i32
    %c0_i32_1 = arith.constant 0 : i32
    %c0_i32_2 = arith.constant 0 : i32
    return %c0_i32, %c0_i32_0, %c0_i32_1 : i32, i32, i32
  }
  func.func @transform_3(%arg0: i32, %arg1: i32) -> (i32, i32) {
    %c0_i32 = arith.constant 0 : i32
    %c0_i32_0 = arith.constant 0 : i32
    %c0_i32_1 = arith.constant 0 : i32
    return %c0_i32, %c0_i32_0 : i32, i32
  }
  func.func @transform_4(%arg0: i32, %arg1: i32) -> (i32, i32, i32, i32) {
    %c0_i32 = arith.constant 0 : i32
    %c0_i32_0 = arith.constant 0 : i32
    %c0_i32_1 = arith.constant 0 : i32
    return %arg0, %arg1, %c0_i32, %c0_i32_0 : i32, i32, i32, i32
  }
}

</mosaic_0001>

<llo_original>
// kernel: tpu_custom_call.1
$region0: #{tpu_custom_call.1}
  #allocation0 [shape = 'u32[]', space=smem, size = 0x4, offset = 0x4, fixed_abs, tag = 'smem constant byte address 0x4 - core index']
  #allocation1 [shape = 'u32[144,128]{1,0:T(1,128)}', space=vmem, size = 0x12000, scoped, tag = 'internal scratch']
  %s0 = inlined_call_operand.hbm [shape: f32[16,16], index: 0, kind: input, shape index: {}]
  %s1 = inlined_call_operand.hbm [shape: f32[2,1,16,32], index: 1, kind: input, shape index: {}]
  %s2 = inlined_call_operand.hbm [shape: f32[3,32,64], index: 2, kind: input, shape index: {}]
  %s3 = inlined_call_operand.vmem [shape: f32[1,64], index: 3, kind: input, shape index: {}]
  %s4 = inlined_call_operand.hbm [shape: f32[2,1,16,64], index: 4, kind: output, shape index: {}]
  %s5 = sld [smem:[#allocation0]]
  $region61: #{tpu_custom_call.1} parent=0
    _
  %s7 = ssub.s32 1, %s5
  %s8 = scalar_select 0, %s7, %s5
  $region1: #{tpu_custom_call.1} parent=0
    #allocation2 [shape = 'u8[8192]{0}', space=vmem, size = 0x2000, scoped, tag = 'input window, operand 0, single buffered']
    #allocation3 [shape = 's32[2]{0}', space=sflag, size = 0x8, scoped, tag = 'scoped memory for tpu_custom_call.1']
    #allocation4 [shape = 's32[2]{0}', space=sflag, size = 0x8, scoped, tag = 'scoped memory for tpu_custom_call.1']
    #allocation5 [shape = 'u8[16384]{0}', space=vmem, size = 0x4000, scoped, tag = 'input window, operand 1']
    #allocation6 [shape = 's32[2]{0}', space=sflag, size = 0x8, scoped, tag = 'scoped memory for tpu_custom_call.1']
    #allocation7 [shape = 'u8[49152]{0}', space=vmem, size = 0xc000, scoped, tag = 'input window, operand 2, single buffered']
    #allocation8 [shape = 'u8[16384]{0}', space=vmem, size = 0x4000, scoped, tag = 'output window, operand 0']
    %9 = vsyncpa [#allocation3], 0
    %10 = vsyncpa [#allocation6], 0
    %s11 = scalar_lea.sflag [#allocation6], 1
    %12 = vsyncpa %s11, 0
    %13 = vsyncpa [#allocation4], 0
    %s14 = scalar_lea.sflag [#allocation4], 1
    %15 = vsyncpa %s14, 0
    loop: start=0, step=1, limit=4
    $region2: #{tpu_custom_call.1} parent=1 // loop_pre_header
      _
    $region3: #{tpu_custom_call.1} parent=1 // loop_header
      %s17 = sphi 0, %s21
      %p18 = scmp.ge.s32.totalorder %s17, 4
      %s24 = sphi 0, %s36
      %s25 = sphi 0, %s32
      %s26 = sphi 0, %s24
      %s27 = sphi 0, %s25
      %s28 = sphi 0, %s26
      %s29 = sphi 0, %s27
      %s37 = sphi 0, %s37
      %s39 = sphi 0, %s37
      %s40 = sphi 0, %s39
      %s54 = sphi 0, %s40
      %s62 = sphi 0, %s64
      %s65 = sphi 0, %s62
      %s66 = sphi 0, %s65
      %s82 = sphi 0, %s66
      %s86 = sphi 0, %s86
      %s88 = sphi 0, %s86
      %s89 = sphi 0, %s88
      %s103 = sphi 0, %s89
      %s107 = sphi 0, %s107
      %s109 = sphi 0, %s107
      %s110 = sphi 0, %s109
      %s124 = sphi 0, %s110
      %s132 = sphi 0, %s134
      %s135 = sphi 0, %s132
      %s136 = sphi 0, %s135
      %s152 = sphi 0, %s136
    $region4: #{tpu_custom_call.1} parent=1 // loop_header_branch
      %20 = sbr.rel (%p18) target = $region8
    $region5: #{tpu_custom_call.1} parent=1 // loop_body
      %s22 = ssub.s32 %s17, 1
      %s23 = ssub.s32 %s17, 2
      %s30 = sadd.s32 1, %s25
      %p31 = scmp.ge.s32.totalorder %s30, 1
      %s32 = scalar_select %p31, 0, %s30
      %s33 = sadd.s32 1, %s24
      %s34 = scalar_select %p31, %s33, %s24
      %p35 = scmp.ge.s32.totalorder %s34, 2
      %s36 = scalar_select %p35, 0, %s34
      %s38 = sadd.s32 %s37, 1
      %p41 = scmp.eq.s32.totalorder %s17, 1
      %p42 = scmp.ne.s32.totalorder %s37, %s39
      %p43 = scmp.eq.s32.totalorder %s17, 0
      %p44 = por %p42, %p43
      %p45 = scmp.ne.s32.totalorder %s37, %s39
      %p46 = scmp.eq.s32.totalorder %s22, 1
      %p47 = por %p45, %p46
      %p48 = scmp.ne.s32.totalorder %s39, %s40
      %p49 = scmp.eq.s32.totalorder %s22, 0
      %p50 = por %p48, %p49
      %p51 = scmp.ne.s32.totalorder %s39, %s40
      %p52 = scmp.eq.s32.totalorder %s23, 1
      %p53 = por %p51, %p52
      %p55 = scmp.ne.s32.totalorder %s40, %s54
      %p56 = scmp.eq.s32.totalorder %s23, 0
      %p57 = por %p55, %p56
      %s58 = ssub.s32 %s24, %s36
      %s59 = ssub.s32 %s25, %s32
      %s60 = sor.u32 %s58, %s59
      %p61 = scmp.eq.s32.totalorder %s60, 0
      %s63 = sadd.s32 %s62, 1
      %s64 = scalar_select %p61, %s62, %s63
      %p67 = pneg %p61
      %p68 = scmp.eq.s32.totalorder %s17, 1
      %p69 = por %p67, %p68
      %p70 = scmp.ne.s32.totalorder %s62, %s65
      %p71 = scmp.eq.s32.totalorder %s17, 0
      %p72 = por %p70, %p71
      %p73 = scmp.ne.s32.totalorder %s62, %s65
      %p74 = scmp.eq.s32.totalorder %s22, 1
      %p75 = por %p73, %p74
      %p76 = scmp.ne.s32.totalorder %s65, %s66
      %p77 = scmp.eq.s32.totalorder %s22, 0
      %p78 = por %p76, %p77
      %p79 = scmp.ne.s32.totalorder %s65, %s66
      %p80 = scmp.eq.s32.totalorder %s23, 1
      %p81 = por %p79, %p80
      %p83 = scmp.ne.s32.totalorder %s66, %s82
      %p84 = scmp.eq.s32.totalorder %s23, 0
      %p85 = por %p83, %p84
      %s87 = sadd.s32 %s86, 1
      %p90 = scmp.eq.s32.totalorder %s17, 1
      %p91 = scmp.ne.s32.totalorder %s86, %s88
      %p92 = scmp.eq.s32.totalorder %s17, 0
      %p93 = por %p91, %p92
      %p94 = scmp.ne.s32.totalorder %s86, %s88
      %p95 = scmp.eq.s32.totalorder %s22, 1
      %p96 = por %p94, %p95
      %p97 = scmp.ne.s32.totalorder %s88, %s89
      %p98 = scmp.eq.s32.totalorder %s22, 0
      %p99 = por %p97, %p98
      %p100 = scmp.ne.s32.totalorder %s88, %s89
      %p101 = scmp.eq.s32.totalorder %s23, 1
      %p102 = por %p100, %p101
      %p104 = scmp.ne.s32.totalorder %s89, %s103
      %p105 = scmp.eq.s32.totalorder %s23, 0
      %p106 = por %p104, %p105
      %s108 = sadd.s32 %s107, 1
      %p111 = scmp.eq.s32.totalorder %s17, 1
      %p112 = scmp.ne.s32.totalorder %s107, %s109
      %p113 = scmp.eq.s32.totalorder %s17, 0
      %p114 = por %p112, %p113
      %p115 = scmp.ne.s32.totalorder %s107, %s109
      %p116 = scmp.eq.s32.totalorder %s22, 1
      %p117 = por %p115, %p116
      %p118 = scmp.ne.s32.totalorder %s109, %s110
      %p119 = scmp.eq.s32.totalorder %s22, 0
      %p120 = por %p118, %p119
      %p121 = scmp.ne.s32.totalorder %s109, %s110
      %p122 = scmp.eq.s32.totalorder %s23, 1
      %p123 = por %p121, %p122
      %p125 = scmp.ne.s32.totalorder %s110, %s124
      %p126 = scmp.eq.s32.totalorder %s23, 0
      %p127 = por %p125, %p126
      %s128 = ssub.s32 %s24, %s36
      %s129 = ssub.s32 %s25, %s32
      %s130 = sor.u32 %s128, %s129
      %p131 = scmp.eq.s32.totalorder %s130, 0
      %s133 = sadd.s32 %s132, 1
      %s134 = scalar_select %p131, %s132, %s133
      %p137 = pneg %p131
      %p138 = scmp.eq.s32.totalorder %s17, 1
      %p139 = por %p137, %p138
      %p140 = scmp.ne.s32.totalorder %s132, %s135
      %p141 = scmp.eq.s32.totalorder %s17, 0
      %p142 = por %p140, %p141
      %p143 = scmp.ne.s32.totalorder %s132, %s135
      %p144 = scmp.eq.s32.totalorder %s22, 1
      %p145 = por %p143, %p144
      %p146 = scmp.ne.s32.totalorder %s135, %s136
      %p147 = scmp.eq.s32.totalorder %s22, 0
      %p148 = por %p146, %p147
      %p149 = scmp.ne.s32.totalorder %s135, %s136
      %p150 = scmp.eq.s32.totalorder %s23, 1
      %p151 = por %p149, %p150
      %p153 = scmp.ne.s32.totalorder %s136, %s152
      %p154 = scmp.eq.s32.totalorder %s23, 0
      %p155 = por %p153, %p154
      %p156 = scmp.le.s32.totalorder 1, %s17
      %p157 = scmp.lt.s32.totalorder %s17, 3
      %p158 = pnand %p156, %p157
      %p159 = pneg %p158
      // Predicated region
      $region9: #{tpu_custom_call.1} parent=5 // pred_check
        _
      $region10: #{tpu_custom_call.1} parent=5 // pred_check_branch
        %161 = sbr.rel (%p158) target = $region12
      $region11: #{tpu_custom_call.1} parent=5 // pred_region
        %s162 = ssub.s32 %s17, 1
        // Predicated region
        $region13: #{tpu_custom_call.1} parent=11 // pred_check
          %p163 = pneg %p50
        $region14: #{tpu_custom_call.1} parent=11 // pred_check_branch
          %165 = sbr.rel (%p163) target = $region16
        $region15: #{tpu_custom_call.1} parent=11 // pred_region
          %s167 = ssub.s32 256, 256
          %168 = vsyncadd [#allocation3], %s167
          %s169 = sshll.u32 [#allocation2], 4
          %s170 = int_to_ptr.vmem [resolvable:$true] %s169
          %175 = dma.hbm_to_vmem [thread:$0]  %s0, 256, %s170, [#allocation3], 128, 128, 8
        $region16: #{tpu_custom_call.1} parent=11 // pred_fallthru
          _
        // Predicated region
        $region17: #{tpu_custom_call.1} parent=11 // pred_check
          %p176 = pneg %p99
        $region18: #{tpu_custom_call.1} parent=11 // pred_check_branch
          %178 = sbr.rel (%p176) target = $region20
        $region19: #{tpu_custom_call.1} parent=11 // pred_region
          %s180 = ssub.s32 1536, 1536
          %181 = vsyncadd [#allocation6], %s180
          %s182 = sshll.u32 [#allocation7], 4
          %s183 = int_to_ptr.vmem [resolvable:$true] %s182
          %188 = dma.hbm_to_vmem [thread:$0]  %s2, 1536, %s183, [#allocation6], 128, 128, 8
        $region20: #{tpu_custom_call.1} parent=11 // pred_fallthru
          _
        // Predicated region
        $region21: #{tpu_custom_call.1} parent=11 // pred_check
          %p189 = pneg %p120
        $region22: #{tpu_custom_call.1} parent=11 // pred_check_branch
          %191 = sbr.rel (%p189) target = $region24
        $region23: #{tpu_custom_call.1} parent=11 // pred_region
          _
        $region24: #{tpu_custom_call.1} parent=11 // pred_fallthru
          _
      $region12: #{tpu_custom_call.1} parent=5 // pred_fallthru
        _
      %p192 = scmp.lt.s32.totalorder %s17, 2
      // Predicated region
      $region25: #{tpu_custom_call.1} parent=5 // pred_check
        %p193 = pneg %p192
      $region26: #{tpu_custom_call.1} parent=5 // pred_check_branch
        %195 = sbr.rel (%p193) target = $region28
      $region27: #{tpu_custom_call.1} parent=5 // pred_region
        // Predicated region
        $region29: #{tpu_custom_call.1} parent=27 // pred_check
          %p196 = pneg %p72
        $region30: #{tpu_custom_call.1} parent=27 // pred_check_branch
          %198 = sbr.rel (%p196) target = $region32
        $region31: #{tpu_custom_call.1} parent=27 // pred_region
          %s199 = sand.u32 %s17, 1
          %s200 = scalar_lea.sflag [#allocation6], %s199
          %s201 = sand.u32 %s62, 1
          %s202 = smul.addr %s201, 16
          %s203 = scalar_lea.vmem [#allocation5], %s202
          %s205 = ssub.s32 256, 256
          %206 = vsyncadd %s200, %s205
          %s207 = smul.addr %s25, 2
          %s208 = smul.addr %s24, 2
          %s209 = sadd.s32 %s207, %s208
          %s210 = smul.addr %s209, 128
          %s211 = scalar_lea.hbm %s1, %s210
          %s212 = sshll.u32 %s203, 4
          %s213 = int_to_ptr.vmem [resolvable:$true] %s212
          %218 = dma.hbm_to_vmem [thread:$0]  %s211, 256, %s213, %s200, 128, 128, 8
        $region32: #{tpu_custom_call.1} parent=27 // pred_fallthru
          _
      $region28: #{tpu_custom_call.1} parent=5 // pred_fallthru
        _
      %p219 = scmp.le.s32.totalorder 1, %s17
      %p220 = scmp.lt.s32.totalorder %s17, 3
      %p221 = pnand %p219, %p220
      %p222 = pneg %p221
      // Predicated region
      $region33: #{tpu_custom_call.1} parent=5 // pred_check
        _
      $region34: #{tpu_custom_call.1} parent=5 // pred_check_branch
        %224 = sbr.rel (%p221) target = $region36
      $region35: #{tpu_custom_call.1} parent=5 // pred_region
        %s225 = ssub.s32 %s17, 1
        // Predicated region
        $region37: #{tpu_custom_call.1} parent=35 // pred_check
          %p226 = pneg %p50
        $region38: #{tpu_custom_call.1} parent=35 // pred_check_branch
          %228 = sbr.rel (%p226) target = $region40
        $region39: #{tpu_custom_call.1} parent=35 // pred_region
          %229 = dma.done [#allocation3], 256
        $region40: #{tpu_custom_call.1} parent=35 // pred_fallthru
          _
        %s230 = sand.u32 %s22, 1
        %s231 = scalar_lea.sflag [#allocation6], %s230
        %s232 = sand.u32 %s65, 1
        %s233 = smul.addr %s232, 16
        %s234 = scalar_lea.vmem [#allocation5], %s233
        // Predicated region
        $region41: #{tpu_custom_call.1} parent=35 // pred_check
          %p235 = pneg %p78
        $region42: #{tpu_custom_call.1} parent=35 // pred_check_branch
          %237 = sbr.rel (%p235) target = $region44
        $region43: #{tpu_custom_call.1} parent=35 // pred_region
          %238 = dma.done %s231, 256
        $region44: #{tpu_custom_call.1} parent=35 // pred_fallthru
          _
        // Predicated region
        $region45: #{tpu_custom_call.1} parent=35 // pred_check
          %p239 = pneg %p99
        $region46: #{tpu_custom_call.1} parent=35 // pred_check_branch
          %241 = sbr.rel (%p239) target = $region48
        $region47: #{tpu_custom_call.1} parent=35 // pred_region
          %242 = dma.done [#allocation6], 1536
        $region48: #{tpu_custom_call.1} parent=35 // pred_fallthru
          _
        %p243 = pneg %p50
        %p244 = pneg %p47
        %s245 = sand.u32 %s22, 1
        %s246 = scalar_lea.sflag [#allocation6], %s245
        %s247 = sand.u32 %s65, 1
        %s248 = smul.addr %s247, 16
        %s249 = scalar_lea.vmem [#allocation5], %s248
        %p250 = pneg %p78
        %p251 = pneg %p75
        %p252 = pneg %p99
        %p253 = pneg %p96
        %p254 = pneg %p120
        %p255 = pneg %p117
        %p256 = pneg %p148
        %p257 = pneg %p145
        %s258 = sand.u32 %s135, 1
        %s259 = scalar_lea.sflag [#allocation4], %s258
        %s260 = sand.u32 %s135, 1
        %s261 = smul.addr %s260, 16
        %s262 = scalar_lea.vmem [#allocation8], %s261
        %v263 = vld [vmem:[#allocation2] sm:$0xff]
        %v264 = vld [vmem:[#allocation2 + $0x8] sm:$0xff]
        %v265 = vld [vmem:[%s234] sm:$0xff]
        %v266 = vld [vmem:[%s234 + $0x8] sm:$0xff]
        %v267 = vld [vmem:[#allocation7] sm:$0xff]
        %v268 = vld [vmem:[#allocation7 + $0x8] sm:$0xff]
        %v269 = vld [vmem:[#allocation7 + $0x10] sm:$0xff]
        %v270 = vld [vmem:[#allocation7 + $0x18] sm:$0xff]
        %v271 = vld [vmem:[%s3] sm:$0x1]
        %v273 = vlaneseq
        %v274 = vshrl.u32 %v273, 7
        %v275 = vsub.s32 0, %v274
        %v276 = vrot.slane %v271, %v275
        %vm278 = vcmask 261120
        %v280 = vsel %vm278, %v265, 0
        %v283 = vsel %vm278, %v266, 0
        %285 = vmatprep.subr.mxu0 0.0
        %286 = vmatpush1.msra.mxu0 %v267
        %287 = vmatprep.subr.mxu0 0.0
        %288 = vmatpush1.msra.mxu0 %v268
        %289 = vmatprep.subr.mxu0 0.0
        %290 = vmatpush1.msra.mxu0 %v269
        %291 = vmatprep.subr.mxu0 0.0
        %292 = vmatpush1.msra.mxu0 %v270
        %293 = vmatprep.subr.mxu0 0.0
        %294 = vmatpush1.msra.mxu0 0.0
        %295 = vmatprep.subr.mxu0 0.0
        %296 = vmatpush1.msra.mxu0 0.0
        %297 = vmatprep.subr.mxu0 0.0
        %298 = vmatpush1.msra.mxu0 0.0
        %299 = vmatprep.subr.mxu0 0.0
        %300 = vmatpush1.msra.mxu0 0.0
        %301 = vmatprep.subr.mxu0 0.0
        %302 = vmatpush1.msra.mxu0 0.0
        %303 = vmatprep.subr.mxu0 0.0
        %304 = vmatpush1.msra.mxu0 0.0
        %305 = vmatprep.subr.mxu0 0.0
        %306 = vmatpush1.msra.mxu0 0.0
        %307 = vmatprep.subr.mxu0 0.0
        %308 = vmatpush1.msra.mxu0 0.0
        %309 = vmatprep.subr.mxu0 0.0
        %310 = vmatpush1.msra.mxu0 0.0
        %311 = vmatprep.subr.mxu0 0.0
        %312 = vmatpush1.msra.mxu0 0.0
        %313 = vmatprep.subr.mxu0 0.0
        %314 = vmatpush1.msra.mxu0 0.0
        %315 = vmatprep.subr.mxu0 0.0
        %316 = vmatpush1.msra.mxu0 0.0
        %317 = vmatprep.subr.mxu0 0.0
        %318 = vmatpush1.msra.mxu0 0.0
        %319 = vmatprep.subr.mxu0 0.0
        %320 = vmatpush1.msra.mxu0 0.0
        %321 = vmatprep.subr.mxu0 0.0
        %322 = vmatpush1.msra.mxu0 0.0
        %323 = vmatprep.subr.mxu0 0.0
        %324 = vmatpush1.msra.mxu0 0.0
        %325 = vmatprep.subr.mxu0 0.0
        %326 = vmatpush1.msra.mxu0 0.0
        %327 = vmatprep.subr.mxu0 0.0
        %328 = vmatpush1.msra.mxu0 0.0
        %329 = vmatprep.subr.mxu0 0.0
        %330 = vmatpush1.msra.mxu0 0.0
        %331 = vmatprep.subr.mxu0 0.0
        %332 = vmatpush1.msra.mxu0 0.0
        %333 = vmatprep.subr.mxu0 0.0
        %334 = vmatpush1.msra.mxu0 0.0
        %335 = vmatprep.subr.mxu0 0.0
        %336 = vmatpush1.msra.mxu0 0.0
        %337 = vmatprep.subr.mxu0 0.0
        %338 = vmatpush1.msra.mxu0 0.0
        %339 = vmatprep.subr.mxu0 0.0
        %340 = vmatpush1.msra.mxu0 0.0
        %341 = vmatprep.subr.mxu0 0.0
        %342 = vmatpush1.msra.mxu0 0.0
        %343 = vmatprep.subr.mxu0 0.0
        %344 = vmatpush1.msra.mxu0 0.0
        %345 = vmatprep.subr.mxu0 0.0
        %346 = vmatpush1.msra.mxu0 0.0
        %347 = vmatprep.subr.mxu0 0.0
        %348 = vmatpush1.msra.mxu0 0.0
        %349 = vmatprep.mubr.f32.mxu0 0.0
        %350 = vmatmul.mubr.f32.gmra.mrb[0].mxu0 %v280
        %v351 = vpop.f32.mrb[0].mxu0
        %v352 = vadd.f32 %v276, %v351
        %v353 = vpop.f32.mrb[0].mxu0
        %354 = vmatprep.mubr.f32.mxu0 0.0
        %355 = vmatmul.mubr.f32.gmra.mrb[0].mxu0 %v283
        %v356 = vpop.f32.mrb[0].mxu0
        %v357 = vadd.f32 %v276, %v356
        %v358 = vpop.f32.mrb[0].mxu0
        %359 = vdwg.mxu0
        %v360 = vmul.f32 %v265, 0.05
        %v361 = vmul.f32 %v266, 0.05
        %vm362 = vcmask 130048
        %v364 = vsel %vm362, %v263, 0
        %v367 = vsel %vm362, %v264, 0
        %369 = vmatprep.subr.mxu0 0.0
        %370 = vmatpush1.msra.mxu0 %v265
        %371 = vmatprep.subr.mxu0 0.0
        %372 = vmatpush1.msra.mxu0 %v266
        %373 = vmatprep.subr.mxu0 0.0
        %374 = vmatpush1.msra.mxu0 0.0
        %375 = vmatprep.subr.mxu0 0.0
        %376 = vmatpush1.msra.mxu0 0.0
        %377 = vmatprep.subr.mxu0 0.0
        %378 = vmatpush1.msra.mxu0 0.0
        %379 = vmatprep.subr.mxu0 0.0
        %380 = vmatpush1.msra.mxu0 0.0
        %381 = vmatprep.subr.mxu0 0.0
        %382 = vmatpush1.msra.mxu0 0.0
        %383 = vmatprep.subr.mxu0 0.0
        %384 = vmatpush1.msra.mxu0 0.0
        %385 = vmatprep.subr.mxu0 0.0
        %386 = vmatpush1.msra.mxu0 0.0
        %387 = vmatprep.subr.mxu0 0.0
        %388 = vmatpush1.msra.mxu0 0.0
        %389 = vmatprep.subr.mxu0 0.0
        %390 = vmatpush1.msra.mxu0 0.0
        %391 = vmatprep.subr.mxu0 0.0
        %392 = vmatpush1.msra.mxu0 0.0
        %393 = vmatprep.subr.mxu0 0.0
        %394 = vmatpush1.msra.mxu0 0.0
        %395 = vmatprep.subr.mxu0 0.0
        %396 = vmatpush1.msra.mxu0 0.0
        %397 = vmatprep.subr.mxu0 0.0
        %398 = vmatpush1.msra.mxu0 0.0
        %399 = vmatprep.subr.mxu0 0.0
        %400 = vmatpush1.msra.mxu0 0.0
        %401 = vmatprep.subr.mxu0 0.0
        %402 = vmatpush1.msra.mxu0 0.0
        %403 = vmatprep.subr.mxu0 0.0
        %404 = vmatpush1.msra.mxu0 0.0
        %405 = vmatprep.subr.mxu0 0.0
        %406 = vmatpush1.msra.mxu0 0.0
        %407 = vmatprep.subr.mxu0 0.0
        %408 = vmatpush1.msra.mxu0 0.0
        %409 = vmatprep.subr.mxu0 0.0
        %410 = vmatpush1.msra.mxu0 0.0
        %411 = vmatprep.subr.mxu0 0.0
        %412 = vmatpush1.msra.mxu0 0.0
        %413 = vmatprep.subr.mxu0 0.0
        %414 = vmatpush1.msra.mxu0 0.0
        %415 = vmatprep.subr.mxu0 0.0
        %416 = vmatpush1.msra.mxu0 0.0
        %417 = vmatprep.subr.mxu0 0.0
        %418 = vmatpush1.msra.mxu0 0.0
        %419 = vmatprep.subr.mxu0 0.0
        %420 = vmatpush1.msra.mxu0 0.0
        %421 = vmatprep.subr.mxu0 0.0
        %422 = vmatpush1.msra.mxu0 0.0
        %423 = vmatprep.subr.mxu0 0.0
        %424 = vmatpush1.msra.mxu0 0.0
        %425 = vmatprep.subr.mxu0 0.0
        %426 = vmatpush1.msra.mxu0 0.0
        %427 = vmatprep.subr.mxu0 0.0
        %428 = vmatpush1.msra.mxu0 0.0
        %429 = vmatprep.subr.mxu0 0.0
        %430 = vmatpush1.msra.mxu0 0.0
        %431 = vmatprep.subr.mxu0 0.0
        %432 = vmatpush1.msra.mxu0 0.0
        %433 = vmatprep.mubr.f32.mxu0 0.0
        %434 = vmatmul.mubr.f32.gmra.mrb[0].mxu0 %v364
        %v435 = vpop.f32.mrb[0].mxu0
        %v436 = vadd.f32 0.0, %v435
        %v437 = vpop.f32.mrb[0].mxu0
        %438 = vmatprep.mubr.f32.mxu0 0.0
        %439 = vmatmul.mubr.f32.gmra.mrb[0].mxu0 %v367
        %v440 = vpop.f32.mrb[0].mxu0
        %v441 = vadd.f32 0.0, %v440
        %v442 = vpop.f32.mrb[0].mxu0
        %443 = vdwg.mxu0
        %v444 = vadd.f32 %v360, %v436
        %v445 = vadd.f32 %v361, %v441
        %s446 = scalar_lea.vmem [#allocation7], 32
        %v447 = vld [vmem:[%s446] sm:$0xff]
        %v448 = vld [vmem:[%s446 + $0x8] sm:$0xff]
        %v449 = vld [vmem:[%s446 + $0x10] sm:$0xff]
        %v450 = vld [vmem:[%s446 + $0x18] sm:$0xff]
        %v452 = vsel %vm278, %v444, 0
        %v455 = vsel %vm278, %v445, 0
        %457 = vmatprep.subr.mxu0 0.0
        %458 = vmatpush1.msra.mxu0 %v447
        %459 = vmatprep.subr.mxu0 0.0
        %460 = vmatpush1.msra.mxu0 %v448
        %461 = vmatprep.subr.mxu0 0.0
        %462 = vmatpush1.msra.mxu0 %v449
        %463 = vmatprep.subr.mxu0 0.0
        %464 = vmatpush1.msra.mxu0 %v450
        %465 = vmatprep.subr.mxu0 0.0
        %466 = vmatpush1.msra.mxu0 0.0
        %467 = vmatprep.subr.mxu0 0.0
        %468 = vmatpush1.msra.mxu0 0.0
        %469 = vmatprep.subr.mxu0 0.0
        %470 = vmatpush1.msra.mxu0 0.0
        %471 = vmatprep.subr.mxu0 0.0
        %472 = vmatpush1.msra.mxu0 0.0
        %473 = vmatprep.subr.mxu0 0.0
        %474 = vmatpush1.msra.mxu0 0.0
        %475 = vmatprep.subr.mxu0 0.0
        %476 = vmatpush1.msra.mxu0 0.0
        %477 = vmatprep.subr.mxu0 0.0
        %478 = vmatpush1.msra.mxu0 0.0
        %479 = vmatprep.subr.mxu0 0.0
        %480 = vmatpush1.msra.mxu0 0.0
        %481 = vmatprep.subr.mxu0 0.0
        %482 = vmatpush1.msra.mxu0 0.0
        %483 = vmatprep.subr.mxu0 0.0
        %484 = vmatpush1.msra.mxu0 0.0
        %485 = vmatprep.subr.mxu0 0.0
        %486 = vmatpush1.msra.mxu0 0.0
        %487 = vmatprep.subr.mxu0 0.0
        %488 = vmatpush1.msra.mxu0 0.0
        %489 = vmatprep.subr.mxu0 0.0
        %490 = vmatpush1.msra.mxu0 0.0
        %491 = vmatprep.subr.mxu0 0.0
        %492 = vmatpush1.msra.mxu0 0.0
        %493 = vmatprep.subr.mxu0 0.0
        %494 = vmatpush1.msra.mxu0 0.0
        %495 = vmatprep.subr.mxu0 0.0
        %496 = vmatpush1.msra.mxu0 0.0
        %497 = vmatprep.subr.mxu0 0.0
        %498 = vmatpush1.msra.mxu0 0.0
        %499 = vmatprep.subr.mxu0 0.0
        %500 = vmatpush1.msra.mxu0 0.0
        %501 = vmatprep.subr.mxu0 0.0
        %502 = vmatpush1.msra.mxu0 0.0
        %503 = vmatprep.subr.mxu0 0.0
        %504 = vmatpush1.msra.mxu0 0.0
        %505 = vmatprep.subr.mxu0 0.0
        %506 = vmatpush1.msra.mxu0 0.0
        %507 = vmatprep.subr.mxu0 0.0
        %508 = vmatpush1.msra.mxu0 0.0
        %509 = vmatprep.subr.mxu0 0.0
        %510 = vmatpush1.msra.mxu0 0.0
        %511 = vmatprep.subr.mxu0 0.0
        %512 = vmatpush1.msra.mxu0 0.0
        %513 = vmatprep.subr.mxu0 0.0
        %514 = vmatpush1.msra.mxu0 0.0
        %515 = vmatprep.subr.mxu0 0.0
        %516 = vmatpush1.msra.mxu0 0.0
        %517 = vmatprep.subr.mxu0 0.0
        %518 = vmatpush1.msra.mxu0 0.0
        %519 = vmatprep.subr.mxu0 0.0
        %520 = vmatpush1.msra.mxu0 0.0
        %521 = vmatprep.mubr.f32.mxu0 0.0
        %522 = vmatmul.mubr.f32.gmra.mrb[0].mxu0 %v452
        %v523 = vpop.f32.mrb[0].mxu0
        %v524 = vadd.f32 0.0, %v523
        %v525 = vpop.f32.mrb[0].mxu0
        %526 = vmatprep.mubr.f32.mxu0 0.0
        %527 = vmatmul.mubr.f32.gmra.mrb[0].mxu0 %v455
        %v528 = vpop.f32.mrb[0].mxu0
        %v529 = vadd.f32 0.0, %v528
        %v530 = vpop.f32.mrb[0].mxu0
        %531 = vdwg.mxu0
        %v532 = vadd.f32 %v352, %v524
        %v533 = vadd.f32 %v357, %v529
        %534 = vmatprep.subr.mxu0 0.0
        %535 = vmatpush1.msra.mxu0 %v444
        %536 = vmatprep.subr.mxu0 0.0
        %537 = vmatpush1.msra.mxu0 %v445
        %538 = vmatprep.subr.mxu0 0.0
        %539 = vmatpush1.msra.mxu0 0.0
        %540 = vmatprep.subr.mxu0 0.0
        %541 = vmatpush1.msra.mxu0 0.0
        %542 = vmatprep.subr.mxu0 0.0
        %543 = vmatpush1.msra.mxu0 0.0
        %544 = vmatprep.subr.mxu0 0.0
        %545 = vmatpush1.msra.mxu0 0.0
        %546 = vmatprep.subr.mxu0 0.0
        %547 = vmatpush1.msra.mxu0 0.0
        %548 = vmatprep.subr.mxu0 0.0
        %549 = vmatpush1.msra.mxu0 0.0
        %550 = vmatprep.subr.mxu0 0.0
        %551 = vmatpush1.msra.mxu0 0.0
        %552 = vmatprep.subr.mxu0 0.0
        %553 = vmatpush1.msra.mxu0 0.0
        %554 = vmatprep.subr.mxu0 0.0
        %555 = vmatpush1.msra.mxu0 0.0
        %556 = vmatprep.subr.mxu0 0.0
        %557 = vmatpush1.msra.mxu0 0.0
        %558 = vmatprep.subr.mxu0 0.0
        %559 = vmatpush1.msra.mxu0 0.0
        %560 = vmatprep.subr.mxu0 0.0
        %561 = vmatpush1.msra.mxu0 0.0
        %562 = vmatprep.subr.mxu0 0.0
        %563 = vmatpush1.msra.mxu0 0.0
        %564 = vmatprep.subr.mxu0 0.0
        %565 = vmatpush1.msra.mxu0 0.0
        %566 = vmatprep.subr.mxu0 0.0
        %567 = vmatpush1.msra.mxu0 0.0
        %568 = vmatprep.subr.mxu0 0.0
        %569 = vmatpush1.msra.mxu0 0.0
        %570 = vmatprep.subr.mxu0 0.0
        %571 = vmatpush1.msra.mxu0 0.0
        %572 = vmatprep.subr.mxu0 0.0
        %573 = vmatpush1.msra.mxu0 0.0
        %574 = vmatprep.subr.mxu0 0.0
        %575 = vmatpush1.msra.mxu0 0.0
        %576 = vmatprep.subr.mxu0 0.0
        %577 = vmatpush1.msra.mxu0 0.0
        %578 = vmatprep.subr.mxu0 0.0
        %579 = vmatpush1.msra.mxu0 0.0
        %580 = vmatprep.subr.mxu0 0.0
        %581 = vmatpush1.msra.mxu0 0.0
        %582 = vmatprep.subr.mxu0 0.0
        %583 = vmatpush1.msra.mxu0 0.0
        %584 = vmatprep.subr.mxu0 0.0
        %585 = vmatpush1.msra.mxu0 0.0
        %586 = vmatprep.subr.mxu0 0.0
        %587 = vmatpush1.msra.mxu0 0.0
        %588 = vmatprep.subr.mxu0 0.0
        %589 = vmatpush1.msra.mxu0 0.0
        %590 = vmatprep.subr.mxu0 0.0
        %591 = vmatpush1.msra.mxu0 0.0
        %592 = vmatprep.subr.mxu0 0.0
        %593 = vmatpush1.msra.mxu0 0.0
        %594 = vmatprep.subr.mxu0 0.0
        %595 = vmatpush1.msra.mxu0 0.0
        %596 = vmatprep.subr.mxu0 0.0
        %597 = vmatpush1.msra.mxu0 0.0
        %598 = vmatprep.mubr.f32.mxu0 0.0
        %599 = vmatmul.mubr.f32.gmra.mrb[0].mxu0 %v364
        %v600 = vpop.f32.mrb[0].mxu0
        %v601 = vadd.f32 0.0, %v600
        %v602 = vpop.f32.mrb[0].mxu0
        %603 = vmatprep.mubr.f32.mxu0 0.0
        %604 = vmatmul.mubr.f32.gmra.mrb[0].mxu0 %v367
        %v605 = vpop.f32.mrb[0].mxu0
        %v606 = vadd.f32 0.0, %v605
        %v607 = vpop.f32.mrb[0].mxu0
        %608 = vdwg.mxu0
        %v609 = vadd.f32 %v360, %v601
        %v610 = vadd.f32 %v361, %v606
        %s611 = scalar_lea.vmem [#allocation7], 64
        %v612 = vld [vmem:[%s611] sm:$0xff]
        %v613 = vld [vmem:[%s611 + $0x8] sm:$0xff]
        %v614 = vld [vmem:[%s611 + $0x10] sm:$0xff]
        %v615 = vld [vmem:[%s611 + $0x18] sm:$0xff]
        %v617 = vsel %vm278, %v609, 0
        %v620 = vsel %vm278, %v610, 0
        %622 = vmatprep.subr.mxu0 0.0
        %623 = vmatpush1.msra.mxu0 %v612
        %624 = vmatprep.subr.mxu0 0.0
        %625 = vmatpush1.msra.mxu0 %v613
        %626 = vmatprep.subr.mxu0 0.0
        %627 = vmatpush1.msra.mxu0 %v614
        %628 = vmatprep.subr.mxu0 0.0
        %629 = vmatpush1.msra.mxu0 %v615
        %630 = vmatprep.subr.mxu0 0.0
        %631 = vmatpush1.msra.mxu0 0.0
        %632 = vmatprep.subr.mxu0 0.0
        %633 = vmatpush1.msra.mxu0 0.0
        %634 = vmatprep.subr.mxu0 0.0
        %635 = vmatpush1.msra.mxu0 0.0
        %636 = vmatprep.subr.mxu0 0.0
        %637 = vmatpush1.msra.mxu0 0.0
        %638 = vmatprep.subr.mxu0 0.0
        %639 = vmatpush1.msra.mxu0 0.0
        %640 = vmatprep.subr.mxu0 0.0
        %641 = vmatpush1.msra.mxu0 0.0
        %642 = vmatprep.subr.mxu0 0.0
        %643 = vmatpush1.msra.mxu0 0.0
        %644 = vmatprep.subr.mxu0 0.0
        %645 = vmatpush1.msra.mxu0 0.0
        %646 = vmatprep.subr.mxu0 0.0
        %647 = vmatpush1.msra.mxu0 0.0
        %648 = vmatprep.subr.mxu0 0.0
        %649 = vmatpush1.msra.mxu0 0.0
        %650 = vmatprep.subr.mxu0 0.0
        %651 = vmatpush1.msra.mxu0 0.0
        %652 = vmatprep.subr.mxu0 0.0
        %653 = vmatpush1.msra.mxu0 0.0
        %654 = vmatprep.subr.mxu0 0.0
        %655 = vmatpush1.msra.mxu0 0.0
        %656 = vmatprep.subr.mxu0 0.0
        %657 = vmatpush1.msra.mxu0 0.0
        %658 = vmatprep.subr.mxu0 0.0
        %659 = vmatpush1.msra.mxu0 0.0
        %660 = vmatprep.subr.mxu0 0.0
        %661 = vmatpush1.msra.mxu0 0.0
        %662 = vmatprep.subr.mxu0 0.0
        %663 = vmatpush1.msra.mxu0 0.0
        %664 = vmatprep.subr.mxu0 0.0
        %665 = vmatpush1.msra.mxu0 0.0
        %666 = vmatprep.subr.mxu0 0.0
        %667 = vmatpush1.msra.mxu0 0.0
        %668 = vmatprep.subr.mxu0 0.0
        %669 = vmatpush1.msra.mxu0 0.0
        %670 = vmatprep.subr.mxu0 0.0
        %671 = vmatpush1.msra.mxu0 0.0
        %672 = vmatprep.subr.mxu0 0.0
        %673 = vmatpush1.msra.mxu0 0.0
        %674 = vmatprep.subr.mxu0 0.0
        %675 = vmatpush1.msra.mxu0 0.0
        %676 = vmatprep.subr.mxu0 0.0
        %677 = vmatpush1.msra.mxu0 0.0
        %678 = vmatprep.subr.mxu0 0.0
        %679 = vmatpush1.msra.mxu0 0.0
        %680 = vmatprep.subr.mxu0 0.0
        %681 = vmatpush1.msra.mxu0 0.0
        %682 = vmatprep.subr.mxu0 0.0
        %683 = vmatpush1.msra.mxu0 0.0
        %684 = vmatprep.subr.mxu0 0.0
        %685 = vmatpush1.msra.mxu0 0.0
        %686 = vmatprep.mubr.f32.mxu0 0.0
        %687 = vmatmul.mubr.f32.gmra.mrb[0].mxu0 %v617
        %v688 = vpop.f32.mrb[0].mxu0
        %v689 = vadd.f32 0.0, %v688
        %v690 = vpop.f32.mrb[0].mxu0
        %691 = vmatprep.mubr.f32.mxu0 0.0
        %692 = vmatmul.mubr.f32.gmra.mrb[0].mxu0 %v620
        %v693 = vpop.f32.mrb[0].mxu0
        %v694 = vadd.f32 0.0, %v693
        %v695 = vpop.f32.mrb[0].mxu0
        %696 = vdwg.mxu0
        %v697 = vadd.f32 %v532, %v689
        %v698 = vadd.f32 %v533, %v694
        %vm699 = vcmask 523264
        %700 = vst.msk [vmem:[%s262] sm:$0xff] %vm699, %v697
        %701 = vst.msk [vmem:[%s262 + $0x8] sm:$0xff] %vm699, %v698
        %s702 = sand.u32 %s135, 1
        %s703 = scalar_lea.sflag [#allocation4], %s702
        %s704 = sand.u32 %s135, 1
        %s705 = smul.addr %s704, 16
        %s706 = scalar_lea.vmem [#allocation8], %s705
        // Predicated region
        $region49: #{tpu_custom_call.1} parent=35 // pred_check
          %p707 = pneg %p145
        $region50: #{tpu_custom_call.1} parent=35 // pred_check_branch
          %709 = sbr.rel (%p707) target = $region52
        $region51: #{tpu_custom_call.1} parent=35 // pred_region
          %s711 = ssub.s32 256, 256
          %712 = vsyncadd %s703, %s711
          %s713 = smul.addr %s27, 2
          %s714 = smul.addr %s26, 2
          %s715 = sadd.s32 %s713, %s714
          %s716 = smul.addr %s715, 128
          %s717 = scalar_lea.hbm %s4, %s716
          %s718 = sshll.u32 %s706, 4
          %s719 = int_to_ptr.vmem [resolvable:$true] %s718
          %724 = dma.vmem_to_hbm [thread:$0]  %s719, 256, %s717, %s703, 128, 128, 8
        $region52: #{tpu_custom_call.1} parent=35 // pred_fallthru
          _
      $region36: #{tpu_custom_call.1} parent=5 // pred_fallthru
        _
      %p725 = scmp.le.s32.totalorder 2, %s17
      // Predicated region
      $region53: #{tpu_custom_call.1} parent=5 // pred_check
        %p726 = pneg %p725
      $region54: #{tpu_custom_call.1} parent=5 // pred_check_branch
        %728 = sbr.rel (%p726) target = $region56
      $region55: #{tpu_custom_call.1} parent=5 // pred_region
        %s729 = ssub.s32 %s17, 2
        // Predicated region
        $region57: #{tpu_custom_call.1} parent=55 // pred_check
          %p730 = pneg %p151
        $region58: #{tpu_custom_call.1} parent=55 // pred_check_branch
          %732 = sbr.rel (%p730) target = $region60
        $region59: #{tpu_custom_call.1} parent=55 // pred_region
          %s733 = sand.u32 %s136, 1
          %s734 = scalar_lea.sflag [#allocation4], %s733
          %s735 = sand.u32 %s136, 1
          %s736 = smul.addr %s735, 16
          %s737 = scalar_lea.vmem [#allocation8], %s736
          %738 = dma.done %s734, 256
        $region60: #{tpu_custom_call.1} parent=55 // pred_fallthru
          _
      $region56: #{tpu_custom_call.1} parent=5 // pred_fallthru
        _
    $region6: #{tpu_custom_call.1} parent=1 // loop_footer
      %s21 = sadd.s32 1, %s17
    $region7: #{tpu_custom_call.1} parent=1 // loop_footer_branch
      %16 = sbr.rel target = $region3
    $region8: #{tpu_custom_call.1} parent=1 // loop_exit
      _
    %739 = vsyncpa [#allocation3], 1
    %s740 = scalar_lea.sflag [#allocation3], 1
    %741 = vsyncpa %s740, 1
    %742 = vsyncpa [#allocation6], 1
    %s743 = scalar_lea.sflag [#allocation6], 1
    %744 = vsyncpa %s743, 1
    %745 = vsyncpa [#allocation4], 1
    %s746 = scalar_lea.sflag [#allocation4], 1
    %747 = vsyncpa %s746, 1

</llo_original>
